<compile_context>
chip_gen: v7x
topology: tpu7x:2x2x1
jax: 0.10.0
libtpu: 0.0.40
codegen_flags: <defaults>
</compile_context>

<pallas_src>
import jax
import jax.numpy as jnp
from jax.experimental import pallas as pl
from jax.experimental.pallas import tpu as pltpu

# Small, TPU-friendly stand-ins for the real dims (t5-small d_model=512,
# BERT pooler=768). Feature dims kept lane-aligned (multiples of 128).
B = 16       # number of job descriptions (batch)
L = 8        # job-description sequence length (post T5 encoding)
D = 128      # shared embedding dim (stands in for 512)
H = 256      # BERT pooler_output dim (stands in for 768)
EPS = 1e-8   # torch.nn.CosineSimilarity default eps


def match_kernel(jdb_ref, res_ref, ss2_ref, out_ref):
    # jdb_ref : [TB, L, D]  bf16  (T5 last_hidden_state batch tile)
    # res_ref : [1, D]      f32   (enc_res = LazyLinear(pooler_output))
    # ss2_ref : [1, 1]      f32   (||enc_res||^2, precomputed, SMEM)
    # out_ref : [TB, 1]     f32   (cosine similarity per job description)
    seq_len = jdb_ref.shape[1]

    # (1) Widening reduce over the sequence axis: bf16 loads, f32 accumulation,
    #     no materialized f32 copy of the tile.  Sum instead of mean; the 1/L
    #     factor is absorbed into the eps clamp below.
    enc_jdb = jnp.sum(jdb_ref[...], axis=1, dtype=jnp.float32)          # [TB, D]

    # (2) Cosine numerator on the VPU (multiply) + XLU (lane reduce).  The
    #     [TB,D] tile is far too small to fill the MXU, and this shares the
    #     same reduce path as ss1 below.
    res = res_ref[...]                                                  # [1, D]
    num = jnp.sum(enc_jdb * res, axis=-1, keepdims=True)                # [TB, 1]

    # (3) Squared norms + rsqrt (EUP slot) instead of sqrt + divide on the VPU.
    #     torch formula: num_mean / max(||mean||*||res||, eps).  With the
    #     sequence sum: num_sum / max(||sum||*||res||, L*eps) is *identical*,
    #     so clamp at (L*eps)^2 on the squared product.
    ss1 = jnp.sum(enc_jdb * enc_jdb, axis=-1, keepdims=True)            # [TB, 1]
    ss2 = ss2_ref[0, 0]                                                 # scalar
    eps_eff = jnp.float32(seq_len * EPS)
    inv_denom = jax.lax.rsqrt(jnp.maximum(ss1 * ss2, eps_eff * eps_eff))
    out_ref[...] = num * inv_denom                                      # [TB, 1]


def _choose_batch_tile(batch, seq, dim, itemsize=2):
    """Pick the per-grid-step batch tile TB.

    Targets:
      (a) each bf16 jdb block is >= ~2 MiB so the ~0.35us/step overhead is
          amortized (mem-bound kernel);
      (b) the double-buffered pair stays under ~24 MiB so it fits v7x's
          64 MiB physical / 32 MiB scoped VMEM (v5e/v6e have 128 MiB and are
          not the binding constraint).
    At the stand-in shapes this returns TB == batch (grid of 1).
    """
    row_bytes = seq * dim * itemsize
    hi = max(1, (12 << 20) // row_bytes)          # per-buffer cap ~12 MiB
    lo = max(1, pl.cdiv(2 << 20, row_bytes))      # per-buffer floor ~2 MiB
    tb = min(batch, max(lo, min(hi, batch)))
    if tb < batch:
        tb = max(8, (tb // 8) * 8)                # keep sublane-aligned tiles
    return tb


def match_model_forward(jdb_hidden, res_pooled, w, b):
    """Pallas forward. Returns cosine similarity of shape [B]."""
    batch, seq, dim = jdb_hidden.shape

    # Hoisted LazyLinear + ||enc_res||^2: tiny GEMV, keeps W out of the
    # kernel's DMA stream.
    enc_res = (res_pooled.astype(jnp.float32) @ w.astype(jnp.float32)
               + b.astype(jnp.float32).reshape(1, dim))                 # [1, D]
    ss2 = jnp.sum(enc_res * enc_res).reshape(1, 1)                      # [1, 1]

    tb = _choose_batch_tile(batch, seq, dim)
    num_tiles = pl.cdiv(batch, tb)
    batch_pad = num_tiles * tb
    if batch_pad != batch:
        # Ragged batch: zero-pad; padded rows clamp to 0 and are sliced off.
        jdb_hidden = jnp.pad(jdb_hidden,
                             ((0, batch_pad - batch), (0, 0), (0, 0)))

    out = pl.pallas_call(
        match_kernel,
        out_shape=jax.ShapeDtypeStruct((batch_pad, 1), jnp.float32),
        grid=(num_tiles,),
        in_specs=[
            pl.BlockSpec((tb, seq, dim), lambda i: (i, 0, 0)),       # jdb batch tile
            pl.BlockSpec((1, dim), lambda i: (0, 0)),                # resident enc_res
            pl.BlockSpec(memory_space=pltpu.MemorySpace.SMEM),       # ||enc_res||^2
        ],
        out_specs=pl.BlockSpec((tb, 1), lambda i: (i, 0)),
        compiler_params=pltpu.CompilerParams(
            # Batch axis is embarrassingly parallel (2 TCs on v7x megacore;
            # inert on v5e/v6e).
            dimension_semantics=("parallel",),
            # Raise above v5e's 16 MiB scoped default; 32 MiB covers the
            # <=24 MiB double-buffered jdb stream and is safe on v7x too.
            vmem_limit_bytes=32 << 20,
        ),
    )(jdb_hidden, enc_res, ss2)
    return out[:batch, 0]


def reference_forward(jdb_hidden, res_pooled, w, b):
    """Pure-JAX reference mirroring the PyTorch module semantics."""
    enc_jdb = jnp.mean(jdb_hidden.astype(jnp.float32), axis=1)          # [B, D]
    enc_res = (res_pooled.astype(jnp.float32) @ w.astype(jnp.float32)
               + b.astype(jnp.float32))                                 # [1, D]
    num = jnp.sum(enc_jdb * enc_res, axis=-1)                           # [B]
    n1 = jnp.linalg.norm(enc_jdb, axis=-1)
    n2 = jnp.linalg.norm(enc_res, axis=-1)
    return num / jnp.maximum(n1 * n2, EPS)


if __name__ == "__main__":
    key = jax.random.PRNGKey(0)
    k1, k2, k3, k4 = jax.random.split(key, 4)

    # Deterministic stand-ins for the pretrained encoder outputs.
    # jdb_hidden is stored bf16 in HBM (halves the dominant DMA stream); all
    # accumulation is f32 in-kernel.
    jdb_hidden = jax.random.normal(k1, (B, L, D), dtype=jnp.float32).astype(jnp.bfloat16)
    res_pooled = jax.random.normal(k2, (1, H), dtype=jnp.float32)

    # Deterministic LazyLinear(512) parameters (here H -> D).
    w = jax.random.normal(k3, (H, D), dtype=jnp.float32) * (1.0 / jnp.sqrt(H))
    bias = jax.random.normal(k4, (D,), dtype=jnp.float32) * 0.01

    out = match_model_forward(jdb_hidden, res_pooled, w, bias)
    out = jax.block_until_ready(out)

    ref = reference_forward(jdb_hidden, res_pooled, w, bias)
    assert out.shape == (B,), out.shape
    # Tolerance covers bf16 load + f32-accumulate vs f32 mean rounding differences.
    assert jnp.allclose(out, ref, atol=2e-3, rtol=2e-3), (out, ref)

    print("KERNEL_OK")
</pallas_src>

<mosaic_0001>
module attributes {stable_mosaic.version = 11 : i64} {
  func.func @match_kernel(%arg0: i32, %arg1: memref<16x8x128xbf16, #tpu.memory_space<vmem>>, %arg2: memref<1x128xf32, #tpu.memory_space<vmem>>, %arg3: memref<1x1xf32, #tpu.memory_space<smem>>, %arg4: memref<16x1xf32, #tpu.memory_space<vmem>>) attributes {dimension_semantics = [#tpu.dimension_semantics<parallel>], iteration_bounds = array<i64: 1>, scalar_prefetch = 0 : i64, scratch_operands = 0 : i64, tpu.core_type = #tpu.core_type<tc>, window_params = [{transform_indices = @transform_0, window_bounds = array<i64: 16, 8, 128>}, {pipeline_mode = #tpu.pipeline_mode<synchronous>, transform_indices = @transform_1, window_bounds = array<i64: 1, 128>}, {transform_indices = @transform_2, window_bounds = array<i64: 1, 1>}, {transform_indices = @transform_3, window_bounds = array<i64: 16, 1>}]} {
    %c0 = arith.constant 0 : index
    %c0_0 = arith.constant 0 : index
    %c0_1 = arith.constant 0 : index
    %0 = vector.load %arg1[%c0, %c0_0, %c0_1] : memref<16x8x128xbf16, #tpu.memory_space<vmem>>, vector<16x8x128xbf16>
    %1 = arith.extf %0 : vector<16x8x128xbf16> to vector<16x8x128xf32>
    %cst = arith.constant dense<0.000000e+00> : vector<16x128xf32>
    %2 = vector.multi_reduction <add>, %1, %cst [1] : vector<16x8x128xf32> to vector<16x128xf32>
    %c0_2 = arith.constant 0 : index
    %c0_3 = arith.constant 0 : index
    %3 = vector.load %arg2[%c0_2, %c0_3] : memref<1x128xf32, #tpu.memory_space<vmem>>, vector<1x128xf32>
    %4 = vector.broadcast %3 : vector<1x128xf32> to vector<16x128xf32>
    %5 = arith.mulf %2, %4 : vector<16x128xf32>
    %cst_4 = arith.constant dense<0.000000e+00> : vector<16xf32>
    %6 = vector.multi_reduction <add>, %5, %cst_4 [1] : vector<16x128xf32> to vector<16xf32>
    %7 = vector.shape_cast %6 : vector<16xf32> to vector<16x1xf32>
    %8 = arith.mulf %2, %2 : vector<16x128xf32>
    %cst_5 = arith.constant dense<0.000000e+00> : vector<16xf32>
    %9 = vector.multi_reduction <add>, %8, %cst_5 [1] : vector<16x128xf32> to vector<16xf32>
    %10 = vector.shape_cast %9 : vector<16xf32> to vector<16x1xf32>
    %c0_6 = arith.constant 0 : index
    %c0_7 = arith.constant 0 : index
    %11 = memref.load %arg3[%c0_6, %c0_7] : memref<1x1xf32, #tpu.memory_space<smem>>
    %12 = vector.broadcast %11 : f32 to vector<16x1xf32>
    %13 = arith.mulf %10, %12 : vector<16x1xf32>
    %cst_8 = arith.constant 7.99999995E-8 : f32
    %cst_9 = arith.constant 7.99999995E-8 : f32
    %14 = arith.mulf %cst_8, %cst_9 : f32
    %15 = vector.broadcast %14 : f32 to vector<16x1xf32>
    %16 = arith.maximumf %13, %15 : vector<16x1xf32>
    %17 = math.rsqrt %16 : vector<16x1xf32>
    %18 = arith.mulf %7, %17 : vector<16x1xf32>
    %c0_10 = arith.constant 0 : index
    %c0_11 = arith.constant 0 : index
    %19 = vector.load %arg4[%c0_10, %c0_11] : memref<16x1xf32, #tpu.memory_space<vmem>>, vector<16x1xf32>
    tpu.vector_store %arg4[%c0_10, %c0_11], %18 {strides = array<i32>} : memref<16x1xf32, #tpu.memory_space<vmem>>, vector<16x1xf32>,
    return
  }
  func.func @transform_0(%arg0: i32) -> (i32, i32, i32) {
    %c0_i32 = arith.constant 0 : i32
    %c0_i32_0 = arith.constant 0 : i32
    %c0_i32_1 = arith.constant 0 : i32
    return %arg0, %c0_i32, %c0_i32_0 : i32, i32, i32
  }
  func.func @transform_1(%arg0: i32) -> (i32, i32) {
    %c0_i32 = arith.constant 0 : i32
    %c0_i32_0 = arith.constant 0 : i32
    %c0_i32_1 = arith.constant 0 : i32
    return %c0_i32, %c0_i32_0 : i32, i32
  }
  func.func @transform_2(%arg0: i32) -> (i32, i32) {
    %c0_i32 = arith.constant 0 : i32
    %c0_i32_0 = arith.constant 0 : i32
    %c0_i32_1 = arith.constant 0 : i32
    return %c0_i32, %c0_i32_0 : i32, i32
  }
  func.func @transform_3(%arg0: i32) -> (i32, i32) {
    %c0_i32 = arith.constant 0 : i32
    %c0_i32_0 = arith.constant 0 : i32
    return %arg0, %c0_i32 : i32, i32
  }
}

</mosaic_0001>

<llo_original>
// kernel: tpu_custom_call.1
$region0: #{tpu_custom_call.1}
  #allocation0 [shape = 'u32[]', space=smem, size = 0x4, offset = 0x4, fixed_abs, tag = 'smem constant byte address 0x4 - core index']
  #allocation1 [shape = 'u32[144,128]{1,0:T(1,128)}', space=vmem, size = 0x12000, scoped, tag = 'internal scratch']
  #allocation2 [shape = 'f32[1,1]{1,0:T(1,128)S(6)}', space=smem, size = 0x200, scoped, tag = 'scoped memory for tpu_custom_call.1']
  %s0 = inlined_call_operand.hbm [shape: bf16[16,8,128], index: 0, kind: input, shape index: {}]
  %s1 = inlined_call_operand.vmem [shape: f32[1,128], index: 1, kind: input, shape index: {}]
  %s2 = inlined_call_operand.<no memory space> [shape: f32[1,1], index: 2, kind: input, shape index: {}]
  %s3 = inlined_call_operand.vmem [shape: f32[16,1], index: 3, kind: output, shape index: {}]
  %s4 = sld [smem:[#allocation0]]
  $region26: #{tpu_custom_call.1} parent=0
    _
  %s6 = ssub.s32 1, %s4
  %s7 = scalar_select 0, %s6, %s4
  %8 = sst [smem:[#allocation2]] %s2
  $region1: #{tpu_custom_call.1} parent=0
    #allocation3 [shape = 'u8[32768]{0}', space=vmem, size = 0x8000, scoped, tag = 'input window, operand 0, single buffered']
    #allocation4 [shape = 's32[1]{0}', space=sflag, size = 0x4, scoped, tag = 'scoped memory for tpu_custom_call.1']
    %9 = vsyncpa [#allocation4], 0
    // Predicated region
    $region2: #{tpu_custom_call.1} parent=1 // pred_check
      _
    $region3: #{tpu_custom_call.1} parent=1 // pred_check_branch
      %11 = sbr.rel (0) target = $region5
    $region4: #{tpu_custom_call.1} parent=1 // pred_region
      %s13 = ssub.s32 1024, 1024
      %14 = vsyncadd [#allocation4], %s13
      %s15 = sshll.u32 [#allocation3], 4
      %s16 = int_to_ptr.vmem [resolvable:$true] %s15
      %21 = dma.hbm_to_vmem [thread:$0]  %s0, 1024, %s16, [#allocation4], 64, 64, 4
    $region5: #{tpu_custom_call.1} parent=1 // pred_fallthru
      _
    // Predicated region
    $region6: #{tpu_custom_call.1} parent=1 // pred_check
      _
    $region7: #{tpu_custom_call.1} parent=1 // pred_check_branch
      %23 = sbr.rel (0) target = $region9
    $region8: #{tpu_custom_call.1} parent=1 // pred_region
      _
    $region9: #{tpu_custom_call.1} parent=1 // pred_fallthru
      _
    // Predicated region
    $region10: #{tpu_custom_call.1} parent=1 // pred_check
      _
    $region11: #{tpu_custom_call.1} parent=1 // pred_check_branch
      %25 = sbr.rel (0) target = $region13
    $region12: #{tpu_custom_call.1} parent=1 // pred_region
      _
    $region13: #{tpu_custom_call.1} parent=1 // pred_fallthru
      _
    // Predicated region
    $region14: #{tpu_custom_call.1} parent=1 // pred_check
      _
    $region15: #{tpu_custom_call.1} parent=1 // pred_check_branch
      %27 = sbr.rel (0) target = $region17
    $region16: #{tpu_custom_call.1} parent=1 // pred_region
      %28 = dma.done [#allocation4], 1024
    $region17: #{tpu_custom_call.1} parent=1 // pred_fallthru
      _
    %v29 = vld [vmem:[#allocation3] sm:$0xf]
    %v30 = vld [vmem:[#allocation3 + $0x4] sm:$0xf]
    %v31 = vld [vmem:[#allocation3 + $0x8] sm:$0xf]
    %v32 = vld [vmem:[#allocation3 + $0xc] sm:$0xf]
    %v33 = vld [vmem:[#allocation3 + $0x10] sm:$0xf]
    %v34 = vld [vmem:[#allocation3 + $0x14] sm:$0xf]
    %v35 = vld [vmem:[#allocation3 + $0x18] sm:$0xf]
    %v36 = vld [vmem:[#allocation3 + $0x1c] sm:$0xf]
    %v37 = vld [vmem:[#allocation3 + $0x20] sm:$0xf]
    %v38 = vld [vmem:[#allocation3 + $0x24] sm:$0xf]
    %v39 = vld [vmem:[#allocation3 + $0x28] sm:$0xf]
    %v40 = vld [vmem:[#allocation3 + $0x2c] sm:$0xf]
    %v41 = vld [vmem:[#allocation3 + $0x30] sm:$0xf]
    %v42 = vld [vmem:[#allocation3 + $0x34] sm:$0xf]
    %v43 = vld [vmem:[#allocation3 + $0x38] sm:$0xf]
    %v44 = vld [vmem:[#allocation3 + $0x3c] sm:$0xf]
    %v45 = vunpack.c.l.bf16 %v29
    %v46 = vunpack.c.l.bf16 %v30
    %v47 = vunpack.c.l.bf16 %v31
    %v48 = vunpack.c.l.bf16 %v32
    %v49 = vunpack.c.l.bf16 %v33
    %v50 = vunpack.c.l.bf16 %v34
    %v51 = vunpack.c.l.bf16 %v35
    %v52 = vunpack.c.l.bf16 %v36
    %v53 = vunpack.c.l.bf16 %v37
    %v54 = vunpack.c.l.bf16 %v38
    %v55 = vunpack.c.l.bf16 %v39
    %v56 = vunpack.c.l.bf16 %v40
    %v57 = vunpack.c.l.bf16 %v41
    %v58 = vunpack.c.l.bf16 %v42
    %v59 = vunpack.c.l.bf16 %v43
    %v60 = vunpack.c.l.bf16 %v44
    %v61 = vrot.slane %v45, 4
    %v62 = vadd.f32 %v45, %v61
    %v63 = vrot.slane %v62, 2
    %v64 = vadd.f32 %v62, %v63
    %v65 = vrot.slane %v64, 1
    %v66 = vadd.f32 %v64, %v65
    %v67 = vrot.slane %v46, 4
    %v68 = vadd.f32 %v46, %v67
    %v69 = vrot.slane %v68, 2
    %v70 = vadd.f32 %v68, %v69
    %v71 = vrot.slane %v70, 1
    %v72 = vadd.f32 %v70, %v71
    %v73 = vrot.slane %v47, 4
    %v74 = vadd.f32 %v47, %v73
    %v75 = vrot.slane %v74, 2
    %v76 = vadd.f32 %v74, %v75
    %v77 = vrot.slane %v76, 1
    %v78 = vadd.f32 %v76, %v77
    %v79 = vrot.slane %v48, 4
    %v80 = vadd.f32 %v48, %v79
    %v81 = vrot.slane %v80, 2
    %v82 = vadd.f32 %v80, %v81
    %v83 = vrot.slane %v82, 1
    %v84 = vadd.f32 %v82, %v83
    %v85 = vrot.slane %v49, 4
    %v86 = vadd.f32 %v49, %v85
    %v87 = vrot.slane %v86, 2
    %v88 = vadd.f32 %v86, %v87
    %v89 = vrot.slane %v88, 1
    %v90 = vadd.f32 %v88, %v89
    %v91 = vrot.slane %v50, 4
    %v92 = vadd.f32 %v50, %v91
    %v93 = vrot.slane %v92, 2
    %v94 = vadd.f32 %v92, %v93
    %v95 = vrot.slane %v94, 1
    %v96 = vadd.f32 %v94, %v95
    %v97 = vrot.slane %v51, 4
    %v98 = vadd.f32 %v51, %v97
    %v99 = vrot.slane %v98, 2
    %v100 = vadd.f32 %v98, %v99
    %v101 = vrot.slane %v100, 1
    %v102 = vadd.f32 %v100, %v101
    %v103 = vrot.slane %v52, 4
    %v104 = vadd.f32 %v52, %v103
    %v105 = vrot.slane %v104, 2
    %v106 = vadd.f32 %v104, %v105
    %v107 = vrot.slane %v106, 1
    %v108 = vadd.f32 %v106, %v107
    %v109 = vrot.slane %v53, 4
    %v110 = vadd.f32 %v53, %v109
    %v111 = vrot.slane %v110, 2
    %v112 = vadd.f32 %v110, %v111
    %v113 = vrot.slane %v112, 1
    %v114 = vadd.f32 %v112, %v113
    %v115 = vrot.slane %v54, 4
    %v116 = vadd.f32 %v54, %v115
    %v117 = vrot.slane %v116, 2
    %v118 = vadd.f32 %v116, %v117
    %v119 = vrot.slane %v118, 1
    %v120 = vadd.f32 %v118, %v119
    %v121 = vrot.slane %v55, 4
    %v122 = vadd.f32 %v55, %v121
    %v123 = vrot.slane %v122, 2
    %v124 = vadd.f32 %v122, %v123
    %v125 = vrot.slane %v124, 1
    %v126 = vadd.f32 %v124, %v125
    %v127 = vrot.slane %v56, 4
    %v128 = vadd.f32 %v56, %v127
    %v129 = vrot.slane %v128, 2
    %v130 = vadd.f32 %v128, %v129
    %v131 = vrot.slane %v130, 1
    %v132 = vadd.f32 %v130, %v131
    %v133 = vrot.slane %v57, 4
    %v134 = vadd.f32 %v57, %v133
    %v135 = vrot.slane %v134, 2
    %v136 = vadd.f32 %v134, %v135
    %v137 = vrot.slane %v136, 1
    %v138 = vadd.f32 %v136, %v137
    %v139 = vrot.slane %v58, 4
    %v140 = vadd.f32 %v58, %v139
    %v141 = vrot.slane %v140, 2
    %v142 = vadd.f32 %v140, %v141
    %v143 = vrot.slane %v142, 1
    %v144 = vadd.f32 %v142, %v143
    %v145 = vrot.slane %v59, 4
    %v146 = vadd.f32 %v59, %v145
    %v147 = vrot.slane %v146, 2
    %v148 = vadd.f32 %v146, %v147
    %v149 = vrot.slane %v148, 1
    %v150 = vadd.f32 %v148, %v149
    %v151 = vrot.slane %v60, 4
    %v152 = vadd.f32 %v60, %v151
    %v153 = vrot.slane %v152, 2
    %v154 = vadd.f32 %v152, %v153
    %v155 = vrot.slane %v154, 1
    %v156 = vadd.f32 %v154, %v155
    %v157 = vld [vmem:[%s1] sm:$0x1]
    %v159 = vlaneseq
    %v160 = vshrl.u32 %v159, 7
    %v161 = vsub.s32 0, %v160
    %v162 = vrot.slane %v157, %v161
    %v164 = vmul.f32 %v66, %v162
    %v165 = vmul.f32 %v72, %v162
    %v166 = vmul.f32 %v78, %v162
    %v167 = vmul.f32 %v84, %v162
    %v168 = vmul.f32 %v90, %v162
    %v169 = vmul.f32 %v96, %v162
    %v170 = vmul.f32 %v102, %v162
    %v171 = vmul.f32 %v108, %v162
    %v172 = vmul.f32 %v114, %v162
    %v173 = vmul.f32 %v120, %v162
    %v174 = vmul.f32 %v126, %v162
    %v175 = vmul.f32 %v132, %v162
    %v176 = vmul.f32 %v138, %v162
    %v177 = vmul.f32 %v144, %v162
    %v178 = vmul.f32 %v150, %v162
    %v179 = vmul.f32 %v156, %v162
    %v196 = vrot.slane %v165, 7
    %vm197 = vcmask 1041409
    %v198 = vsel %vm197, %v196, %v164
    %v199 = vrot.slane %v166, 6
    %vm200 = vcmask 1042434
    %v201 = vsel %vm200, %v199, %v198
    %v202 = vrot.slane %v167, 5
    %vm203 = vcmask 1043459
    %v204 = vsel %vm203, %v202, %v201
    %v205 = vrot.slane %v168, 4
    %vm206 = vcmask 1044484
    %v207 = vsel %vm206, %v205, %v204
    %v208 = vrot.slane %v169, 3
    %vm209 = vcmask 1045509
    %v210 = vsel %vm209, %v208, %v207
    %v211 = vrot.slane %v170, 2
    %vm212 = vcmask 1046534
    %v213 = vsel %vm212, %v211, %v210
    %v214 = vrot.slane %v171, 1
    %vm215 = vcmask 1047559
    %v216 = vsel %vm215, %v214, %v213
    %v217 = vrot.slane %v173, 7
    %v218 = vsel %vm197, %v217, %v172
    %v219 = vrot.slane %v174, 6
    %v220 = vsel %vm200, %v219, %v218
    %v221 = vrot.slane %v175, 5
    %v222 = vsel %vm203, %v221, %v220
    %v223 = vrot.slane %v176, 4
    %v224 = vsel %vm206, %v223, %v222
    %v225 = vrot.slane %v177, 3
    %v226 = vsel %vm209, %v225, %v224
    %v227 = vrot.slane %v178, 2
    %v228 = vsel %vm212, %v227, %v226
    %v229 = vrot.slane %v179, 1
    %v230 = vsel %vm215, %v229, %v228
    %233 = vadd.xlane.f32.xlu0 %v216
    %v234 = vpop.xlane.xlu0 %233
    %235 = vadd.xlane.f32.xlu0 %v230
    %v236 = vpop.xlane.xlu0 %235
    %v237 = vmul.f32 %v66, %v66
    %v238 = vmul.f32 %v72, %v72
    %v239 = vmul.f32 %v78, %v78
    %v240 = vmul.f32 %v84, %v84
    %v241 = vmul.f32 %v90, %v90
    %v242 = vmul.f32 %v96, %v96
    %v243 = vmul.f32 %v102, %v102
    %v244 = vmul.f32 %v108, %v108
    %v245 = vmul.f32 %v114, %v114
    %v246 = vmul.f32 %v120, %v120
    %v247 = vmul.f32 %v126, %v126
    %v248 = vmul.f32 %v132, %v132
    %v249 = vmul.f32 %v138, %v138
    %v250 = vmul.f32 %v144, %v144
    %v251 = vmul.f32 %v150, %v150
    %v252 = vmul.f32 %v156, %v156
    %v269 = vsel %vm197, %v238, %v237
    %v270 = vsel %vm200, %v239, %v269
    %v271 = vsel %vm203, %v240, %v270
    %v272 = vsel %vm206, %v241, %v271
    %v273 = vsel %vm209, %v242, %v272
    %v274 = vsel %vm212, %v243, %v273
    %v275 = vsel %vm215, %v244, %v274
    %v276 = vsel %vm197, %v246, %v245
    %v277 = vsel %vm200, %v247, %v276
    %v278 = vsel %vm203, %v248, %v277
    %v279 = vsel %vm206, %v249, %v278
    %v280 = vsel %vm209, %v250, %v279
    %v281 = vsel %vm212, %v251, %v280
    %v282 = vsel %vm215, %v252, %v281
    %285 = vadd.xlane.f32.xlu0 %v275
    %v286 = vpop.xlane.xlu0 %285
    %287 = vadd.xlane.f32.xlu0 %v282
    %v288 = vpop.xlane.xlu0 %287
    %s289 = sld [smem:[#allocation2]]
    %v290 = vstv %s289
    %v291 = vmul.f32 %v286, %v290
    %v292 = vmul.f32 %v288, %v290
    %v293 = vmax.f32 %v291, 6.4e-15
    %v294 = vmax.f32 %v292, 6.4e-15
    %v295 = vrsqrt.pop %v293
    %v296 = vrsqrt.pop %v294
    %v297 = vmul.f32 %v234, %v295
    %v298 = vmul.f32 %v236, %v296
    %vm299 = vcmask 7168
    %300 = vst.msk [vmem:[%s3] sm:$0xff] %vm299, %v297
    %301 = vst.msk [vmem:[%s3 + $0x8] sm:$0xff] %vm299, %v298
    // Predicated region
    $region18: #{tpu_custom_call.1} parent=1 // pred_check
      _
    $region19: #{tpu_custom_call.1} parent=1 // pred_check_branch
      %303 = sbr.rel (0) target = $region21
    $region20: #{tpu_custom_call.1} parent=1 // pred_region
      _
    $region21: #{tpu_custom_call.1} parent=1 // pred_fallthru
      _
    // Predicated region
    $region22: #{tpu_custom_call.1} parent=1 // pred_check
      _
    $region23: #{tpu_custom_call.1} parent=1 // pred_check_branch
      %305 = sbr.rel (0) target = $region25
    $region24: #{tpu_custom_call.1} parent=1 // pred_region
      _
    $region25: #{tpu_custom_call.1} parent=1 // pred_fallthru
      _
    %306 = vsyncpa [#allocation4], 1

</llo_original>
